<compile_context>
chip_gen: v6e
topology: v6e:2x2x1
jax: 0.10.0
libtpu: 0.0.40
codegen_flags: <defaults>
</compile_context>

<pallas_src>
import functools

import jax
import jax.numpy as jnp
from jax import lax
from jax.experimental import pallas as pl
from jax.experimental.pallas import tpu as pltpu


# --------------------------- fused forward kernel ---------------------------

def _fused_kernel(x_ref, m_ref, w1_ref, b1_ref, w2_ref, b2_ref, w3_ref, b3_ref,
                  o_ref):
    # ---- 3-layer MLP on the MXU (features on sublanes, rows on lanes) ----
    x = x_ref[...]                                                    # (9, TN)
    h1 = jnp.dot(w1_ref[...], x, preferred_element_type=jnp.float32) + b1_ref[...]
    h1 = jnp.maximum(h1, 0.0)                                         # (16, TN)
    h2 = jnp.dot(w2_ref[...], h1, preferred_element_type=jnp.float32) + b2_ref[...]
    h2 = jnp.maximum(h2, 0.0)                                         # (32, TN)
    y = jnp.dot(w3_ref[...], h2, preferred_element_type=jnp.float32) + b3_ref[...]  # (6, TN)

    # ---- 6D -> 3x3 rotation (Gram-Schmidt + cross), per-lane elementwise ----
    a1x, a1y, a1z = y[0:1], y[1:2], y[2:3]                            # (1, TN)
    a2x, a2y, a2z = y[3:4], y[4:5], y[5:6]

    is_trans = m_ref[...] != 0.0                                      # (1, TN)

    eps2 = jnp.float32(1e-24)       # eps = 1e-12 on the norm -> eps^2 on |a|^2
    s1 = a1x * a1x + a1y * a1y + a1z * a1z
    inv1 = lax.rsqrt(jnp.maximum(s1, eps2))                           # EUP
    inv1 = jnp.where(is_trans, 1.0, inv1)   # identity on translation lanes
    b1x, b1y, b1z = a1x * inv1, a1y * inv1, a1z * inv1

    d = b1x * a2x + b1y * a2y + b1z * a2z
    d = jnp.where(is_trans, 0.0, d)         # no projection on translation lanes
    u2x, u2y, u2z = a2x - d * b1x, a2y - d * b1y, a2z - d * b1z
    s2 = u2x * u2x + u2y * u2y + u2z * u2z
    inv2 = lax.rsqrt(jnp.maximum(s2, eps2))                           # EUP
    inv2 = jnp.where(is_trans, 1.0, inv2)
    b2x, b2y, b2z = u2x * inv2, u2y * inv2, u2z * inv2

    zero = jnp.zeros_like(s1)
    b3x = jnp.where(is_trans, zero, b1y * b2z - b1z * b2y)
    b3y = jnp.where(is_trans, zero, b1z * b2x - b1x * b2z)
    b3z = jnp.where(is_trans, zero, b1x * b2y - b1y * b2x)

    # Translation lanes now carry (y0..y5, 0, 0, 0); rotation lanes carry the
    # flattened row-major 3x3.  Single full-tile unmasked store.
    packed = jnp.concatenate(
        (b1x, b1y, b1z, b2x, b2y, b2z, b3x, b3y, b3z), axis=0)        # (9, TN)
    o_ref[...] = packed.astype(o_ref.dtype)


# --------------------------------- wrapper ----------------------------------

@functools.partial(jax.jit, static_argnames=("block_n",))
def rotation_translation_net(x, params, *, block_n=512):
    """x: (B, J, 9) float32 -> (B, J, 9) float32."""
    bsz, nj, feat = x.shape
    assert feat == 9
    w1, b1, w2, b2, w3, b3 = params

    n = bsz * nj
    # lane tile: multiple of 128, clamped to the (rounded-up) problem size
    tn = min(block_n, pl.cdiv(n, 128) * 128)
    n_pad = pl.cdiv(n, tn) * tn
    grid = (n_pad // tn,)

    # rows on the lane axis (layout plumbing only)
    xt = jnp.pad(x.reshape(n, 9).T, ((0, 0), (0, n_pad - n)))        # (9, n_pad)
    # per-lane mask: 1.0 where the flattened row is joint 0 of its batch elem
    mask = ((jnp.arange(n_pad) % nj) == 0).astype(jnp.float32)[None, :]

    col = lambda shape: pl.BlockSpec(shape, lambda i: (0, i))   # lane-tiled
    rep = lambda shape: pl.BlockSpec(shape, lambda i: (0, 0))   # resident weights

    out_t = pl.pallas_call(
        _fused_kernel,
        out_shape=jax.ShapeDtypeStruct((9, n_pad), jnp.float32),
        grid=grid,
        in_specs=[
            col((9, tn)),            # x^T
            col((1, tn)),            # translation-lane mask
            rep((16, 9)), rep((16, 1)),
            rep((32, 16)), rep((32, 1)),
            rep((6, 32)), rep((6, 1)),
        ],
        out_specs=col((9, tn)),
        compiler_params=pltpu.CompilerParams(
            dimension_semantics=("parallel",)),
    )(xt, mask, w1, b1, w2, b2, w3, b3)

    return out_t[:, :n].T.reshape(bsz, nj, 9)


# ------------------------------- params & ref --------------------------------

def init_params(key):
    """Deterministic init mirroring nn.Linear shapes (W: out x in, b: out x 1)."""
    def linear(key, fan_in, fan_out):
        kw, kb = jax.random.split(key)
        bound = 1.0 / jnp.sqrt(jnp.float32(fan_in))
        w = jax.random.uniform(kw, (fan_out, fan_in), jnp.float32, -bound, bound)
        b = jax.random.uniform(kb, (fan_out, 1), jnp.float32, -bound, bound)
        return w, b

    k1, k2, k3 = jax.random.split(key, 3)
    w1, b1 = linear(k1, 9, 16)
    w2, b2 = linear(k2, 16, 32)
    w3, b3 = linear(k3, 32, 6)
    return (w1, b1, w2, b2, w3, b3)


def _reference(x, params):
    """Pure-JAX reference of the same forward (for a sanity check)."""
    w1, b1, w2, b2, w3, b3 = params
    bsz, nj, _ = x.shape
    h = x.reshape(-1, 9)
    h = jnp.maximum(h @ w1.T + b1[:, 0], 0.0)
    h = jnp.maximum(h @ w2.T + b2[:, 0], 0.0)
    y = (h @ w3.T + b3[:, 0]).reshape(bsz, nj, 6)
    trans = jnp.pad(y[:, 0, :], ((0, 0), (0, 3)))[:, None, :]
    d6 = y[:, 1:, :]
    a1, a2 = d6[..., :3], d6[..., 3:]
    b1v = a1 / jnp.maximum(jnp.sqrt(jnp.sum(a1 * a1, -1, keepdims=True)), 1e-12)
    dd = jnp.sum(b1v * a2, -1, keepdims=True)
    u2 = a2 - dd * b1v
    b2v = u2 / jnp.maximum(jnp.sqrt(jnp.sum(u2 * u2, -1, keepdims=True)), 1e-12)
    b3v = jnp.cross(b1v, b2v)
    rot = jnp.concatenate([b1v, b2v, b3v], axis=-1)
    return jnp.concatenate([trans, rot], axis=1)


if __name__ == "__main__":
    key = jax.random.PRNGKey(0)
    k_params, k_x = jax.random.split(key)

    B, J = 2, 8
    params = init_params(k_params)
    x = jax.random.normal(k_x, (B, J, 9), jnp.float32)

    out = jax.block_until_ready(rotation_translation_net(x, params))

    assert out.shape == (B, J, 9), out.shape
    assert out.dtype == jnp.float32

    ref = _reference(x, params)
    assert bool(jnp.allclose(out, ref, atol=1e-2, rtol=1e-2)), float(
        jnp.max(jnp.abs(out - ref)))
    print("KERNEL_OK")
</pallas_src>

<mosaic_0001>
module attributes {stable_mosaic.version = 11 : i64} {
  func.func @_fused_kernel(%arg0: i32, %arg1: memref<9x128xf32, #tpu.memory_space<vmem>>, %arg2: memref<1x128xf32, #tpu.memory_space<vmem>>, %arg3: memref<16x9xf32, #tpu.memory_space<vmem>>, %arg4: memref<16x1xf32, #tpu.memory_space<vmem>>, %arg5: memref<32x16xf32, #tpu.memory_space<vmem>>, %arg6: memref<32x1xf32, #tpu.memory_space<vmem>>, %arg7: memref<6x32xf32, #tpu.memory_space<vmem>>, %arg8: memref<6x1xf32, #tpu.memory_space<vmem>>, %arg9: memref<9x128xf32, #tpu.memory_space<vmem>>) attributes {dimension_semantics = [#tpu.dimension_semantics<parallel>], iteration_bounds = array<i64: 1>, scalar_prefetch = 0 : i64, scratch_operands = 0 : i64, tpu.core_type = #tpu.core_type<tc>, window_params = [{transform_indices = @transform_0, window_bounds = array<i64: 9, 128>}, {transform_indices = @transform_1, window_bounds = array<i64: 1, 128>}, {pipeline_mode = #tpu.pipeline_mode<synchronous>, transform_indices = @transform_2, window_bounds = array<i64: 16, 9>}, {pipeline_mode = #tpu.pipeline_mode<synchronous>, transform_indices = @transform_3, window_bounds = array<i64: 16, 1>}, {pipeline_mode = #tpu.pipeline_mode<synchronous>, transform_indices = @transform_4, window_bounds = array<i64: 32, 16>}, {pipeline_mode = #tpu.pipeline_mode<synchronous>, transform_indices = @transform_5, window_bounds = array<i64: 32, 1>}, {pipeline_mode = #tpu.pipeline_mode<synchronous>, transform_indices = @transform_6, window_bounds = array<i64: 6, 32>}, {pipeline_mode = #tpu.pipeline_mode<synchronous>, transform_indices = @transform_7, window_bounds = array<i64: 6, 1>}, {transform_indices = @transform_8, window_bounds = array<i64: 9, 128>}]} {
    %c0 = arith.constant 0 : index
    %c0_0 = arith.constant 0 : index
    %0 = vector.load %arg1[%c0, %c0_0] : memref<9x128xf32, #tpu.memory_space<vmem>>, vector<9x128xf32>
    %c0_1 = arith.constant 0 : index
    %c0_2 = arith.constant 0 : index
    %1 = vector.load %arg3[%c0_1, %c0_2] : memref<16x9xf32, #tpu.memory_space<vmem>>, vector<16x9xf32>
    %cst = arith.constant dense<0.000000e+00> : vector<16x128xf32>
    %2 = tpu.matmul %1, %0, %cst {dimension_numbers = #tpu.dot_dimension_numbers<[1], [0], [0], [1], [0, 0, 1, 1], [], []>} : vector<16x9xf32>, vector<9x128xf32>, vector<16x128xf32> -> vector<16x128xf32>
    %c0_3 = arith.constant 0 : index
    %c0_4 = arith.constant 0 : index
    %3 = vector.load %arg4[%c0_3, %c0_4] : memref<16x1xf32, #tpu.memory_space<vmem>>, vector<16x1xf32>
    %4 = vector.broadcast %3 : vector<16x1xf32> to vector<16x128xf32>
    %5 = arith.addf %2, %4 : vector<16x128xf32>
    %cst_5 = arith.constant 0.000000e+00 : f32
    %6 = vector.broadcast %cst_5 : f32 to vector<16x128xf32>
    %7 = arith.maximumf %5, %6 : vector<16x128xf32>
    %c0_6 = arith.constant 0 : index
    %c0_7 = arith.constant 0 : index
    %8 = vector.load %arg5[%c0_6, %c0_7] : memref<32x16xf32, #tpu.memory_space<vmem>>, vector<32x16xf32>
    %cst_8 = arith.constant dense<0.000000e+00> : vector<32x128xf32>
    %9 = tpu.matmul %8, %7, %cst_8 {dimension_numbers = #tpu.dot_dimension_numbers<[1], [0], [0], [1], [0, 0, 1, 1], [], []>} : vector<32x16xf32>, vector<16x128xf32>, vector<32x128xf32> -> vector<32x128xf32>
    %c0_9 = arith.constant 0 : index
    %c0_10 = arith.constant 0 : index
    %10 = vector.load %arg6[%c0_9, %c0_10] : memref<32x1xf32, #tpu.memory_space<vmem>>, vector<32x1xf32>
    %11 = vector.broadcast %10 : vector<32x1xf32> to vector<32x128xf32>
    %12 = arith.addf %9, %11 : vector<32x128xf32>
    %cst_11 = arith.constant 0.000000e+00 : f32
    %13 = vector.broadcast %cst_11 : f32 to vector<32x128xf32>
    %14 = arith.maximumf %12, %13 : vector<32x128xf32>
    %c0_12 = arith.constant 0 : index
    %c0_13 = arith.constant 0 : index
    %15 = vector.load %arg7[%c0_12, %c0_13] : memref<6x32xf32, #tpu.memory_space<vmem>>, vector<6x32xf32>
    %cst_14 = arith.constant dense<0.000000e+00> : vector<6x128xf32>
    %16 = tpu.matmul %15, %14, %cst_14 {dimension_numbers = #tpu.dot_dimension_numbers<[1], [0], [0], [1], [0, 0, 1, 1], [], []>} : vector<6x32xf32>, vector<32x128xf32>, vector<6x128xf32> -> vector<6x128xf32>
    %c0_15 = arith.constant 0 : index
    %c0_16 = arith.constant 0 : index
    %17 = vector.load %arg8[%c0_15, %c0_16] : memref<6x1xf32, #tpu.memory_space<vmem>>, vector<6x1xf32>
    %18 = vector.broadcast %17 : vector<6x1xf32> to vector<6x128xf32>
    %19 = arith.addf %16, %18 : vector<6x128xf32>
    %20 = vector.extract_strided_slice %19 {offsets = [0, 0], sizes = [1, 128], strides = [1, 1]} : vector<6x128xf32> to vector<1x128xf32>
    %21 = vector.extract_strided_slice %19 {offsets = [1, 0], sizes = [1, 128], strides = [1, 1]} : vector<6x128xf32> to vector<1x128xf32>
    %22 = vector.extract_strided_slice %19 {offsets = [2, 0], sizes = [1, 128], strides = [1, 1]} : vector<6x128xf32> to vector<1x128xf32>
    %23 = vector.extract_strided_slice %19 {offsets = [3, 0], sizes = [1, 128], strides = [1, 1]} : vector<6x128xf32> to vector<1x128xf32>
    %24 = vector.extract_strided_slice %19 {offsets = [4, 0], sizes = [1, 128], strides = [1, 1]} : vector<6x128xf32> to vector<1x128xf32>
    %25 = vector.extract_strided_slice %19 {offsets = [5, 0], sizes = [1, 128], strides = [1, 1]} : vector<6x128xf32> to vector<1x128xf32>
    %c0_17 = arith.constant 0 : index
    %c0_18 = arith.constant 0 : index
    %26 = vector.load %arg2[%c0_17, %c0_18] : memref<1x128xf32, #tpu.memory_space<vmem>>, vector<1x128xf32>
    %cst_19 = arith.constant 0.000000e+00 : f32
    %27 = vector.broadcast %cst_19 : f32 to vector<1x128xf32>
    %28 = arith.cmpf one, %26, %27 : vector<1x128xf32>
    %29 = arith.mulf %20, %20 : vector<1x128xf32>
    %30 = arith.mulf %21, %21 : vector<1x128xf32>
    %31 = arith.addf %29, %30 : vector<1x128xf32>
    %32 = arith.mulf %22, %22 : vector<1x128xf32>
    %33 = arith.addf %31, %32 : vector<1x128xf32>
    %cst_20 = arith.constant 1.000000e-24 : f32
    %34 = vector.broadcast %cst_20 : f32 to vector<1x128xf32>
    %35 = arith.maximumf %33, %34 : vector<1x128xf32>
    %36 = math.rsqrt %35 : vector<1x128xf32>
    %cst_21 = arith.constant 1.000000e+00 : f32
    %37 = vector.broadcast %cst_21 : f32 to vector<1x128xf32>
    %38 = arith.select %28, %37, %36 : vector<1x128xi1>, vector<1x128xf32>
    %39 = arith.mulf %20, %38 : vector<1x128xf32>
    %40 = arith.mulf %21, %38 : vector<1x128xf32>
    %41 = arith.mulf %22, %38 : vector<1x128xf32>
    %42 = arith.mulf %39, %23 : vector<1x128xf32>
    %43 = arith.mulf %40, %24 : vector<1x128xf32>
    %44 = arith.addf %42, %43 : vector<1x128xf32>
    %45 = arith.mulf %41, %25 : vector<1x128xf32>
    %46 = arith.addf %44, %45 : vector<1x128xf32>
    %cst_22 = arith.constant 0.000000e+00 : f32
    %47 = vector.broadcast %cst_22 : f32 to vector<1x128xf32>
    %48 = arith.select %28, %47, %46 : vector<1x128xi1>, vector<1x128xf32>
    %49 = arith.mulf %48, %39 : vector<1x128xf32>
    %50 = arith.subf %23, %49 : vector<1x128xf32>
    %51 = arith.mulf %48, %40 : vector<1x128xf32>
    %52 = arith.subf %24, %51 : vector<1x128xf32>
    %53 = arith.mulf %48, %41 : vector<1x128xf32>
    %54 = arith.subf %25, %53 : vector<1x128xf32>
    %55 = arith.mulf %50, %50 : vector<1x128xf32>
    %56 = arith.mulf %52, %52 : vector<1x128xf32>
    %57 = arith.addf %55, %56 : vector<1x128xf32>
    %58 = arith.mulf %54, %54 : vector<1x128xf32>
    %59 = arith.addf %57, %58 : vector<1x128xf32>
    %cst_23 = arith.constant 1.000000e-24 : f32
    %60 = vector.broadcast %cst_23 : f32 to vector<1x128xf32>
    %61 = arith.maximumf %59, %60 : vector<1x128xf32>
    %62 = math.rsqrt %61 : vector<1x128xf32>
    %cst_24 = arith.constant 1.000000e+00 : f32
    %63 = vector.broadcast %cst_24 : f32 to vector<1x128xf32>
    %64 = arith.select %28, %63, %62 : vector<1x128xi1>, vector<1x128xf32>
    %65 = arith.mulf %50, %64 : vector<1x128xf32>
    %66 = arith.mulf %52, %64 : vector<1x128xf32>
    %67 = arith.mulf %54, %64 : vector<1x128xf32>
    %cst_25 = arith.constant 0.000000e+00 : f32
    %68 = vector.broadcast %cst_25 : f32 to vector<1x128xf32>
    %69 = arith.mulf %40, %67 : vector<1x128xf32>
    %70 = arith.mulf %41, %66 : vector<1x128xf32>
    %71 = arith.subf %69, %70 : vector<1x128xf32>
    %72 = arith.select %28, %68, %71 : vector<1x128xi1>, vector<1x128xf32>
    %73 = arith.mulf %41, %65 : vector<1x128xf32>
    %74 = arith.mulf %39, %67 : vector<1x128xf32>
    %75 = arith.subf %73, %74 : vector<1x128xf32>
    %76 = arith.select %28, %68, %75 : vector<1x128xi1>, vector<1x128xf32>
    %77 = arith.mulf %39, %66 : vector<1x128xf32>
    %78 = arith.mulf %40, %65 : vector<1x128xf32>
    %79 = arith.subf %77, %78 : vector<1x128xf32>
    %80 = arith.select %28, %68, %79 : vector<1x128xi1>, vector<1x128xf32>
    %81 = tpu.concatenate %39, %40, %41, %65, %66, %67, %72, %76, %80 in 0 : vector<1x128xf32>, vector<1x128xf32>, vector<1x128xf32>, vector<1x128xf32>, vector<1x128xf32>, vector<1x128xf32>, vector<1x128xf32>, vector<1x128xf32>, vector<1x128xf32> -> vector<9x128xf32>
    %c0_26 = arith.constant 0 : index
    %c0_27 = arith.constant 0 : index
    %82 = vector.load %arg9[%c0_26, %c0_27] : memref<9x128xf32, #tpu.memory_space<vmem>>, vector<9x128xf32>
    tpu.vector_store %arg9[%c0_26, %c0_27], %81 {strides = array<i32>} : memref<9x128xf32, #tpu.memory_space<vmem>>, vector<9x128xf32>,
    return
  }
  func.func @transform_0(%arg0: i32) -> (i32, i32) {
    %c0_i32 = arith.constant 0 : i32
    %c0_i32_0 = arith.constant 0 : i32
    return %c0_i32, %arg0 : i32, i32
  }
  func.func @transform_1(%arg0: i32) -> (i32, i32) {
    %c0_i32 = arith.constant 0 : i32
    %c0_i32_0 = arith.constant 0 : i32
    return %c0_i32, %arg0 : i32, i32
  }
  func.func @transform_2(%arg0: i32) -> (i32, i32) {
    %c0_i32 = arith.constant 0 : i32
    %c0_i32_0 = arith.constant 0 : i32
    %c0_i32_1 = arith.constant 0 : i32
    return %c0_i32, %c0_i32_0 : i32, i32
  }
  func.func @transform_3(%arg0: i32) -> (i32, i32) {
    %c0_i32 = arith.constant 0 : i32
    %c0_i32_0 = arith.constant 0 : i32
    %c0_i32_1 = arith.constant 0 : i32
    return %c0_i32, %c0_i32_0 : i32, i32
  }
  func.func @transform_4(%arg0: i32) -> (i32, i32) {
    %c0_i32 = arith.constant 0 : i32
    %c0_i32_0 = arith.constant 0 : i32
    %c0_i32_1 = arith.constant 0 : i32
    return %c0_i32, %c0_i32_0 : i32, i32
  }
  func.func @transform_5(%arg0: i32) -> (i32, i32) {
    %c0_i32 = arith.constant 0 : i32
    %c0_i32_0 = arith.constant 0 : i32
    %c0_i32_1 = arith.constant 0 : i32
    return %c0_i32, %c0_i32_0 : i32, i32
  }
  func.func @transform_6(%arg0: i32) -> (i32, i32) {
    %c0_i32 = arith.constant 0 : i32
    %c0_i32_0 = arith.constant 0 : i32
    %c0_i32_1 = arith.constant 0 : i32
    return %c0_i32, %c0_i32_0 : i32, i32
  }
  func.func @transform_7(%arg0: i32) -> (i32, i32) {
    %c0_i32 = arith.constant 0 : i32
    %c0_i32_0 = arith.constant 0 : i32
    %c0_i32_1 = arith.constant 0 : i32
    return %c0_i32, %c0_i32_0 : i32, i32
  }
  func.func @transform_8(%arg0: i32) -> (i32, i32) {
    %c0_i32 = arith.constant 0 : i32
    %c0_i32_0 = arith.constant 0 : i32
    return %c0_i32, %arg0 : i32, i32
  }
}

</mosaic_0001>

<llo_original>
// kernel: rotation_translation_net.1
$region0: #{rotation_translation_net.1}
  #allocation0 [shape = 'u32[]', space=smem, size = 0x4, offset = 0x4, fixed_abs, tag = 'smem constant byte address 0x4 - core index']
  #allocation1 [shape = 'u32[144,128]{1,0:T(1,128)}', space=vmem, size = 0x12000, scoped, tag = 'internal scratch']
  %s0 = inlined_call_operand.vmem [shape: f32[9,128], index: 0, kind: input, shape index: {}]
  %s1 = inlined_call_operand.vmem [shape: f32[1,128], index: 1, kind: input, shape index: {}]
  %s2 = inlined_call_operand.vmem [shape: f32[16,9], index: 2, kind: input, shape index: {}]
  %s3 = inlined_call_operand.vmem [shape: f32[16,1], index: 3, kind: input, shape index: {}]
  %s4 = inlined_call_operand.vmem [shape: f32[32,16], index: 4, kind: input, shape index: {}]
  %s5 = inlined_call_operand.vmem [shape: f32[32,1], index: 5, kind: input, shape index: {}]
  %s6 = inlined_call_operand.vmem [shape: f32[6,32], index: 6, kind: input, shape index: {}]
  %s7 = inlined_call_operand.vmem [shape: f32[6,1], index: 7, kind: input, shape index: {}]
  %s8 = inlined_call_operand.vmem [shape: f32[9,128], index: 8, kind: output, shape index: {}]
  %s9 = sld [smem:[#allocation0]]
  $region42: #{rotation_translation_net.1} parent=0
    _
  %s11 = ssub.s32 1, %s9
  %s12 = scalar_select 0, %s11, %s9
  // Predicated region
  $region2: #{rotation_translation_net.1} parent=0 // pred_check
    _
  $region3: #{rotation_translation_net.1} parent=0 // pred_check_branch
    %14 = sbr.rel (0) target = $region5
  $region4: #{rotation_translation_net.1} parent=0 // pred_region
    _
  $region5: #{rotation_translation_net.1} parent=0 // pred_fallthru
    _
  // Predicated region
  $region6: #{rotation_translation_net.1} parent=0 // pred_check
    _
  $region7: #{rotation_translation_net.1} parent=0 // pred_check_branch
    %16 = sbr.rel (0) target = $region9
  $region8: #{rotation_translation_net.1} parent=0 // pred_region
    _
  $region9: #{rotation_translation_net.1} parent=0 // pred_fallthru
    _
  // Predicated region
  $region10: #{rotation_translation_net.1} parent=0 // pred_check
    _
  $region11: #{rotation_translation_net.1} parent=0 // pred_check_branch
    %18 = sbr.rel (0) target = $region13
  $region12: #{rotation_translation_net.1} parent=0 // pred_region
    _
  $region13: #{rotation_translation_net.1} parent=0 // pred_fallthru
    _
  // Predicated region
  $region14: #{rotation_translation_net.1} parent=0 // pred_check
    _
  $region15: #{rotation_translation_net.1} parent=0 // pred_check_branch
    %20 = sbr.rel (0) target = $region17
  $region16: #{rotation_translation_net.1} parent=0 // pred_region
    _
  $region17: #{rotation_translation_net.1} parent=0 // pred_fallthru
    _
  // Predicated region
  $region18: #{rotation_translation_net.1} parent=0 // pred_check
    _
  $region19: #{rotation_translation_net.1} parent=0 // pred_check_branch
    %22 = sbr.rel (0) target = $region21
  $region20: #{rotation_translation_net.1} parent=0 // pred_region
    _
  $region21: #{rotation_translation_net.1} parent=0 // pred_fallthru
    _
  // Predicated region
  $region22: #{rotation_translation_net.1} parent=0 // pred_check
    _
  $region23: #{rotation_translation_net.1} parent=0 // pred_check_branch
    %24 = sbr.rel (0) target = $region25
  $region24: #{rotation_translation_net.1} parent=0 // pred_region
    _
  $region25: #{rotation_translation_net.1} parent=0 // pred_fallthru
    _
  // Predicated region
  $region26: #{rotation_translation_net.1} parent=0 // pred_check
    _
  $region27: #{rotation_translation_net.1} parent=0 // pred_check_branch
    %26 = sbr.rel (0) target = $region29
  $region28: #{rotation_translation_net.1} parent=0 // pred_region
    _
  $region29: #{rotation_translation_net.1} parent=0 // pred_fallthru
    _
  // Predicated region
  $region30: #{rotation_translation_net.1} parent=0 // pred_check
    _
  $region31: #{rotation_translation_net.1} parent=0 // pred_check_branch
    %28 = sbr.rel (0) target = $region33
  $region32: #{rotation_translation_net.1} parent=0 // pred_region
    _
  $region33: #{rotation_translation_net.1} parent=0 // pred_fallthru
    _
  %v29 = vld [vmem:[%s0] sm:$0xff]
  %v30 = vld [vmem:[%s0 + $0x8] sm:$0x1]
  %v31 = vld [vmem:[%s2] sm:$0xff]
  %v32 = vld [vmem:[%s2 + $0x8] sm:$0xff]
  %v33 = vld [vmem:[%s3] sm:$0xff]
  %v34 = vld [vmem:[%s3 + $0x8] sm:$0xff]
  %36 = vset.pattern.permute.xlu0 0
  %37 = vperm.xlu0 %36, %v33
  %v38 = vpop.permute.xlu0 %37
  %41 = vset.pattern.permute.xlu0 0
  %42 = vperm.xlu0 %41, %v34
  %v43 = vpop.permute.xlu0 %42
  %vm45 = vcmask 72704
  %v47 = vsel %vm45, %v31, 0
  %v50 = vsel %vm45, %v32, 0
  %vm52 = vcmask 1040384
  %v54 = vsel %vm52, %v30, 0
  %56 = vmatprep.subr.mxu0 0.0
  %57 = vmatpush1.msra.mxu0 0.0
  %58 = vmatprep.subr.mxu0 0.0
  %59 = vmatpush1.msra.mxu0 0.0
  %60 = vmatprep.subr.mxu0 0.0
  %61 = vmatpush1.msra.mxu0 0.0
  %62 = vmatprep.subr.mxu0 0.0
  %63 = vmatpush1.msra.mxu0 0.0
  %64 = vmatprep.subr.mxu0 0.0
  %65 = vmatpush1.msra.mxu0 0.0
  %66 = vmatprep.subr.mxu0 0.0
  %67 = vmatpush1.msra.mxu0 0.0
  %68 = vmatprep.subr.mxu0 0.0
  %69 = vmatpush1.msra.mxu0 0.0
  %70 = vmatprep.subr.mxu0 0.0
  %71 = vmatpush1.msra.mxu0 0.0
  %72 = vmatprep.subr.mxu0 0.0
  %73 = vmatpush1.msra.mxu0 0.0
  %74 = vmatprep.subr.mxu0 0.0
  %75 = vmatpush1.msra.mxu0 0.0
  %76 = vmatprep.subr.mxu0 0.0
  %77 = vmatpush1.msra.mxu0 0.0
  %78 = vmatprep.subr.mxu0 0.0
  %79 = vmatpush1.msra.mxu0 0.0
  %80 = vmatprep.subr.mxu0 0.0
  %81 = vmatpush1.msra.mxu0 0.0
  %82 = vmatprep.subr.mxu0 0.0
  %83 = vmatpush1.msra.mxu0 0.0
  %84 = vmatprep.subr.mxu0 0.0
  %85 = vmatpush1.msra.mxu0 %v54
  %86 = vmatprep.subr.mxu0 0.0
  %87 = vmatpush1.msra.mxu0 %v29
  %88 = vmatprep.subr.mxu0 0.0
  %89 = vmatpush2.msra.mxu0 0.0
  %90 = vmatprep.subr.mxu0 0.0
  %91 = vmatpush2.msra.mxu0 0.0
  %92 = vmatprep.subr.mxu0 0.0
  %93 = vmatpush2.msra.mxu0 0.0
  %94 = vmatprep.subr.mxu0 0.0
  %95 = vmatpush2.msra.mxu0 0.0
  %96 = vmatprep.subr.mxu0 0.0
  %97 = vmatpush2.msra.mxu0 0.0
  %98 = vmatprep.subr.mxu0 0.0
  %99 = vmatpush2.msra.mxu0 0.0
  %100 = vmatprep.subr.mxu0 0.0
  %101 = vmatpush2.msra.mxu0 0.0
  %102 = vmatprep.subr.mxu0 0.0
  %103 = vmatpush2.msra.mxu0 0.0
  %104 = vmatprep.subr.mxu0 0.0
  %105 = vmatpush2.msra.mxu0 0.0
  %106 = vmatprep.subr.mxu0 0.0
  %107 = vmatpush2.msra.mxu0 0.0
  %108 = vmatprep.subr.mxu0 0.0
  %109 = vmatpush2.msra.mxu0 0.0
  %110 = vmatprep.subr.mxu0 0.0
  %111 = vmatpush2.msra.mxu0 0.0
  %112 = vmatprep.subr.mxu0 0.0
  %113 = vmatpush2.msra.mxu0 0.0
  %114 = vmatprep.subr.mxu0 0.0
  %115 = vmatpush2.msra.mxu0 0.0
  %116 = vmatprep.subr.mxu0 0.0
  %117 = vmatpush2.msra.mxu0 0.0
  %118 = vmatprep.subr.mxu0 0.0
  %119 = vmatpush2.msra.mxu0 0.0
  %120 = vmatprep.mubr.f32.mxu0 0.0
  %121 = vmatmul.mubr.f32.gmra.mxu0 %v47
  %v122 = vpop.f32.mrf.mxu0
  %v123 = vadd.f32 %v38, %v122
  %v124 = vpop.f32.mrf.mxu0
  %125 = vmatprep.mubr.f32.mxu0 0.0
  %126 = vmatmul.mubr.f32.gmra.mxu0 %v50
  %v127 = vpop.f32.mrf.mxu0
  %v128 = vadd.f32 %v43, %v127
  %v129 = vpop.f32.mrf.mxu0
  %130 = vdwg.mxu0
  %v131 = vmax.f32 %v123, 0.0
  %v132 = vmax.f32 %v128, 0.0
  %v133 = vld [vmem:[%s4] sm:$0xff]
  %v134 = vld [vmem:[%s4 + $0x8] sm:$0xff]
  %v135 = vld [vmem:[%s4 + $0x10] sm:$0xff]
  %v136 = vld [vmem:[%s4 + $0x18] sm:$0xff]
  %v137 = vld [vmem:[%s5] sm:$0xff]
  %v138 = vld [vmem:[%s5 + $0x8] sm:$0xff]
  %v139 = vld [vmem:[%s5 + $0x10] sm:$0xff]
  %v140 = vld [vmem:[%s5 + $0x18] sm:$0xff]
  %142 = vset.pattern.permute.xlu0 0
  %143 = vperm.xlu0 %142, %v137
  %v144 = vpop.permute.xlu0 %143
  %147 = vset.pattern.permute.xlu0 0
  %148 = vperm.xlu0 %147, %v138
  %v149 = vpop.permute.xlu0 %148
  %152 = vset.pattern.permute.xlu0 0
  %153 = vperm.xlu0 %152, %v139
  %v154 = vpop.permute.xlu0 %153
  %157 = vset.pattern.permute.xlu0 0
  %158 = vperm.xlu0 %157, %v140
  %v159 = vpop.permute.xlu0 %158
  %vm161 = vcmask 130048
  %v163 = vsel %vm161, %v133, 0
  %v166 = vsel %vm161, %v134, 0
  %v169 = vsel %vm161, %v135, 0
  %v172 = vsel %vm161, %v136, 0
  %174 = vmatprep.subr.mxu0 0.0
  %175 = vmatpush1.msra.mxu0 0.0
  %176 = vmatprep.subr.mxu0 0.0
  %177 = vmatpush1.msra.mxu0 0.0
  %178 = vmatprep.subr.mxu0 0.0
  %179 = vmatpush1.msra.mxu0 0.0
  %180 = vmatprep.subr.mxu0 0.0
  %181 = vmatpush1.msra.mxu0 0.0
  %182 = vmatprep.subr.mxu0 0.0
  %183 = vmatpush1.msra.mxu0 0.0
  %184 = vmatprep.subr.mxu0 0.0
  %185 = vmatpush1.msra.mxu0 0.0
  %186 = vmatprep.subr.mxu0 0.0
  %187 = vmatpush1.msra.mxu0 0.0
  %188 = vmatprep.subr.mxu0 0.0
  %189 = vmatpush1.msra.mxu0 0.0
  %190 = vmatprep.subr.mxu0 0.0
  %191 = vmatpush1.msra.mxu0 0.0
  %192 = vmatprep.subr.mxu0 0.0
  %193 = vmatpush1.msra.mxu0 0.0
  %194 = vmatprep.subr.mxu0 0.0
  %195 = vmatpush1.msra.mxu0 0.0
  %196 = vmatprep.subr.mxu0 0.0
  %197 = vmatpush1.msra.mxu0 0.0
  %198 = vmatprep.subr.mxu0 0.0
  %199 = vmatpush1.msra.mxu0 0.0
  %200 = vmatprep.subr.mxu0 0.0
  %201 = vmatpush1.msra.mxu0 0.0
  %202 = vmatprep.subr.mxu0 0.0
  %203 = vmatpush1.msra.mxu0 %v132
  %204 = vmatprep.subr.mxu0 0.0
  %205 = vmatpush1.msra.mxu0 %v131
  %206 = vmatprep.subr.mxu0 0.0
  %207 = vmatpush2.msra.mxu0 0.0
  %208 = vmatprep.subr.mxu0 0.0
  %209 = vmatpush2.msra.mxu0 0.0
  %210 = vmatprep.subr.mxu0 0.0
  %211 = vmatpush2.msra.mxu0 0.0
  %212 = vmatprep.subr.mxu0 0.0
  %213 = vmatpush2.msra.mxu0 0.0
  %214 = vmatprep.subr.mxu0 0.0
  %215 = vmatpush2.msra.mxu0 0.0
  %216 = vmatprep.subr.mxu0 0.0
  %217 = vmatpush2.msra.mxu0 0.0
  %218 = vmatprep.subr.mxu0 0.0
  %219 = vmatpush2.msra.mxu0 0.0
  %220 = vmatprep.subr.mxu0 0.0
  %221 = vmatpush2.msra.mxu0 0.0
  %222 = vmatprep.subr.mxu0 0.0
  %223 = vmatpush2.msra.mxu0 0.0
  %224 = vmatprep.subr.mxu0 0.0
  %225 = vmatpush2.msra.mxu0 0.0
  %226 = vmatprep.subr.mxu0 0.0
  %227 = vmatpush2.msra.mxu0 0.0
  %228 = vmatprep.subr.mxu0 0.0
  %229 = vmatpush2.msra.mxu0 0.0
  %230 = vmatprep.subr.mxu0 0.0
  %231 = vmatpush2.msra.mxu0 0.0
  %232 = vmatprep.subr.mxu0 0.0
  %233 = vmatpush2.msra.mxu0 0.0
  %234 = vmatprep.subr.mxu0 0.0
  %235 = vmatpush2.msra.mxu0 0.0
  %236 = vmatprep.subr.mxu0 0.0
  %237 = vmatpush2.msra.mxu0 0.0
  %238 = vmatprep.mubr.f32.mxu0 0.0
  %239 = vmatmul.mubr.f32.gmra.mxu0 %v163
  %v240 = vpop.f32.mrf.mxu0
  %v241 = vadd.f32 %v144, %v240
  %v242 = vpop.f32.mrf.mxu0
  %243 = vmatprep.mubr.f32.mxu0 0.0
  %244 = vmatmul.mubr.f32.gmra.mxu0 %v166
  %v245 = vpop.f32.mrf.mxu0
  %v246 = vadd.f32 %v149, %v245
  %v247 = vpop.f32.mrf.mxu0
  %248 = vmatprep.mubr.f32.mxu0 0.0
  %249 = vmatmul.mubr.f32.gmra.mxu0 %v169
  %v250 = vpop.f32.mrf.mxu0
  %v251 = vadd.f32 %v154, %v250
  %v252 = vpop.f32.mrf.mxu0
  %253 = vmatprep.mubr.f32.mxu0 0.0
  %254 = vmatmul.mubr.f32.gmra.mxu0 %v172
  %v255 = vpop.f32.mrf.mxu0
  %v256 = vadd.f32 %v159, %v255
  %v257 = vpop.f32.mrf.mxu0
  %258 = vdwg.mxu0
  %v259 = vmax.f32 %v241, 0.0
  %v260 = vmax.f32 %v246, 0.0
  %v261 = vmax.f32 %v251, 0.0
  %v262 = vmax.f32 %v256, 0.0
  %v263 = vld [vmem:[%s6] sm:$0x3f]
  %v264 = vld [vmem:[%s7] sm:$0x3f]
  %266 = vset.pattern.permute.xlu0 0
  %267 = vperm.xlu0 %266, %v264
  %v268 = vpop.permute.xlu0 %267
  %vm270 = vcmask 261120
  %v272 = vsel %vm270, %v263, 0
  %274 = vmatprep.subr.mxu0 0.0
  %275 = vmatpush1.msra.mxu0 0.0
  %276 = vmatprep.subr.mxu0 0.0
  %277 = vmatpush1.msra.mxu0 0.0
  %278 = vmatprep.subr.mxu0 0.0
  %279 = vmatpush1.msra.mxu0 0.0
  %280 = vmatprep.subr.mxu0 0.0
  %281 = vmatpush1.msra.mxu0 0.0
  %282 = vmatprep.subr.mxu0 0.0
  %283 = vmatpush1.msra.mxu0 0.0
  %284 = vmatprep.subr.mxu0 0.0
  %285 = vmatpush1.msra.mxu0 0.0
  %286 = vmatprep.subr.mxu0 0.0
  %287 = vmatpush1.msra.mxu0 0.0
  %288 = vmatprep.subr.mxu0 0.0
  %289 = vmatpush1.msra.mxu0 0.0
  %290 = vmatprep.subr.mxu0 0.0
  %291 = vmatpush1.msra.mxu0 0.0
  %292 = vmatprep.subr.mxu0 0.0
  %293 = vmatpush1.msra.mxu0 0.0
  %294 = vmatprep.subr.mxu0 0.0
  %295 = vmatpush1.msra.mxu0 0.0
  %296 = vmatprep.subr.mxu0 0.0
  %297 = vmatpush1.msra.mxu0 0.0
  %298 = vmatprep.subr.mxu0 0.0
  %299 = vmatpush1.msra.mxu0 %v262
  %300 = vmatprep.subr.mxu0 0.0
  %301 = vmatpush1.msra.mxu0 %v261
  %302 = vmatprep.subr.mxu0 0.0
  %303 = vmatpush1.msra.mxu0 %v260
  %304 = vmatprep.subr.mxu0 0.0
  %305 = vmatpush1.msra.mxu0 %v259
  %306 = vmatprep.subr.mxu0 0.0
  %307 = vmatpush2.msra.mxu0 0.0
  %308 = vmatprep.subr.mxu0 0.0
  %309 = vmatpush2.msra.mxu0 0.0
  %310 = vmatprep.subr.mxu0 0.0
  %311 = vmatpush2.msra.mxu0 0.0
  %312 = vmatprep.subr.mxu0 0.0
  %313 = vmatpush2.msra.mxu0 0.0
  %314 = vmatprep.subr.mxu0 0.0
  %315 = vmatpush2.msra.mxu0 0.0
  %316 = vmatprep.subr.mxu0 0.0
  %317 = vmatpush2.msra.mxu0 0.0
  %318 = vmatprep.subr.mxu0 0.0
  %319 = vmatpush2.msra.mxu0 0.0
  %320 = vmatprep.subr.mxu0 0.0
  %321 = vmatpush2.msra.mxu0 0.0
  %322 = vmatprep.subr.mxu0 0.0
  %323 = vmatpush2.msra.mxu0 0.0
  %324 = vmatprep.subr.mxu0 0.0
  %325 = vmatpush2.msra.mxu0 0.0
  %326 = vmatprep.subr.mxu0 0.0
  %327 = vmatpush2.msra.mxu0 0.0
  %328 = vmatprep.subr.mxu0 0.0
  %329 = vmatpush2.msra.mxu0 0.0
  %330 = vmatprep.subr.mxu0 0.0
  %331 = vmatpush2.msra.mxu0 0.0
  %332 = vmatprep.subr.mxu0 0.0
  %333 = vmatpush2.msra.mxu0 0.0
  %334 = vmatprep.subr.mxu0 0.0
  %335 = vmatpush2.msra.mxu0 0.0
  %336 = vmatprep.subr.mxu0 0.0
  %337 = vmatpush2.msra.mxu0 0.0
  %338 = vmatprep.mubr.f32.mxu0 0.0
  %339 = vmatmul.mubr.f32.gmra.mxu0 %v272
  %v340 = vpop.f32.mrf.mxu0
  %v341 = vadd.f32 %v268, %v340
  %v342 = vpop.f32.mrf.mxu0
  %343 = vdwg.mxu0
  %v344 = vld [vmem:[%s1] sm:$0x1]
  %vm345 = vcmp.ne.f32.partialorder %v344, 0.0
  %v346 = vmul.f32 %v341, %v341
  %v348 = vrot.slane %v346, 1
  %v350 = vadd.f32 %v346, %v348
  %v351 = vrot.slane %v346, 2
  %v353 = vadd.f32 %v350, %v351
  %v354 = vmax.f32 %v353, 1e-24
  %v355 = vrsqrt.pop %v354
  %v356 = vsel %vm345, 1.0, %v355
  %v357 = vmul.f32 %v341, %v356
  %v359 = vlaneseq
  %v360 = vshrl.u32 %v359, 7
  %v361 = vsub.s32 0, %v360
  %v362 = vrot.slane %v356, %v361
  %v364 = vmul.f32 %v341, %v362
  %v366 = vrot.slane %v341, 3
  %v368 = vmul.f32 %v357, %v366
  %v369 = vmul.f32 %v364, %v366
  %v371 = vrot.slane %v369, 1
  %v373 = vadd.f32 %v368, %v371
  %v374 = vrot.slane %v369, 2
  %v376 = vadd.f32 %v373, %v374
  %v377 = vsel %vm345, 0.0, %v376
  %v378 = vmul.f32 %v377, %v357
  %v380 = vlaneseq
  %v381 = vshrl.u32 %v380, 7
  %v382 = vsub.s32 0, %v381
  %v383 = vrot.slane %v378, %v382
  %v385 = vsub.f32 %v341, %v383
  %v388 = vunpack.c.l.s4 1966171168
  %v389 = vunpack.c.0.s8 %v388
  %v390 = vlaneseq
  %v391 = vshrl.u32 %v390, 7
  %v392 = vsub.s32 %v389, %v391
  %v393 = vrot.slane %v364, %v392
  %v394 = vcombine.high %v393, %v393
  %v396 = vunpack.c.l.s4 1966171168
  %v397 = vunpack.c.0.s8 %v396
  %v398 = vlaneseq
  %v399 = vshrl.u32 %v398, 7
  %v400 = vsub.s32 %v397, %v399
  %v401 = vrot.slane %v393, %v400
  %v403 = vunpack.c.l.s4 1966171168
  %v404 = vunpack.c.0.s8 %v403
  %v405 = vlaneseq
  %v406 = vshrl.u32 %v405, 7
  %v407 = vsub.s32 %v404, %v406
  %v408 = vrot.slane %v394, %v407
  %v410 = vmul.f32 %v377, %v408
  %v412 = vlaneseq
  %v413 = vshrl.u32 %v412, 7
  %v414 = vsub.s32 0, %v413
  %v415 = vrot.slane %v410, %v414
  %v417 = vsub.f32 %v341, %v415
  %v418 = vcombine.high %v401, %v401
  %v420 = vmul.f32 %v377, %v418
  %v422 = vlaneseq
  %v423 = vshrl.u32 %v422, 7
  %v424 = vsub.s32 0, %v423
  %v425 = vrot.slane %v420, %v424
  %v427 = vsub.f32 %v341, %v425
  %v428 = vmul.f32 %v385, %v385
  %v429 = vmul.f32 %v417, %v417
  %v431 = vrot.slane %v429, 1
  %v433 = vadd.f32 %v428, %v431
  %v434 = vmul.f32 %v427, %v427
  %v436 = vrot.slane %v434, 2
  %v438 = vadd.f32 %v433, %v436
  %v439 = vmax.f32 %v438, 1e-24
  %v440 = vrsqrt.pop %v439
  %v443 = vunpack.c.l.s4 1966171168
  %v444 = vunpack.c.0.s8 %v443
  %v445 = vlaneseq
  %v446 = vshrl.u32 %v445, 7
  %v447 = vsub.s32 %v444, %v446
  %v448 = vrot.slane %v440, %v447
  %v449 = vcombine.high %v448, %v448
  %v451 = vunpack.c.l.s4 1966171168
  %v452 = vunpack.c.0.s8 %v451
  %v453 = vlaneseq
  %v454 = vshrl.u32 %v453, 7
  %v455 = vsub.s32 %v452, %v454
  %v456 = vrot.slane %v449, %v455
  %v457 = vcombine.high %v456, %v456
  %v459 = vsel %vm345, 1.0, %v457
  %v461 = vlaneseq
  %v462 = vshrl.u32 %v461, 7
  %v463 = vsub.s32 0, %v462
  %v464 = vrot.slane %v459, %v463
  %v466 = vmul.f32 %v385, %v464
  %v467 = vmul.f32 %v417, %v464
  %v468 = vmul.f32 %v427, %v464
  %v470 = vrot.slane %v468, 4
  %v472 = vmul.f32 %v364, %v470
  %v474 = vrot.slane %v467, 2
  %v476 = vmul.f32 %v364, %v474
  %v478 = vrot.slane %v476, 1
  %v480 = vsub.f32 %v472, %v478
  %v483 = vunpack.c.l.s4 1966171168
  %v484 = vunpack.c.0.s8 %v483
  %v485 = vlaneseq
  %v486 = vshrl.u32 %v485, 7
  %v487 = vsub.s32 %v484, %v486
  %v488 = vrot.slane %v480, %v487
  %v489 = vcombine.high %v488, %v488
  %v491 = vunpack.c.l.s4 1966171168
  %v492 = vunpack.c.0.s8 %v491
  %v493 = vlaneseq
  %v494 = vshrl.u32 %v493, 7
  %v495 = vsub.s32 %v492, %v494
  %v496 = vrot.slane %v489, %v495
  %v498 = vsel %vm345, 0.0, %v496
  %v500 = vrot.slane %v466, 1
  %v502 = vmul.f32 %v364, %v500
  %v503 = vrot.slane %v468, 5
  %v505 = vmul.f32 %v357, %v503
  %v507 = vrot.slane %v505, 6
  %v509 = vsub.f32 %v502, %v507
  %v512 = vunpack.c.l.s4 1966171168
  %v513 = vunpack.c.0.s8 %v512
  %v514 = vlaneseq
  %v515 = vshrl.u32 %v514, 7
  %v516 = vsub.s32 %v513, %v515
  %v517 = vrot.slane %v509, %v516
  %v519 = vunpack.c.l.s4 1966171168
  %v520 = vunpack.c.0.s8 %v519
  %v521 = vlaneseq
  %v522 = vshrl.u32 %v521, 7
  %v523 = vsub.s32 %v520, %v522
  %v524 = vrot.slane %v517, %v523
  %v525 = vcombine.high %v524, %v524
  %v527 = vsel %vm345, 0.0, %v525
  %v528 = vrot.slane %v467, 4
  %v530 = vmul.f32 %v357, %v528
  %v531 = vrot.slane %v466, 2
  %v533 = vmul.f32 %v364, %v531
  %v535 = vrot.slane %v533, 1
  %v537 = vsub.f32 %v530, %v535
  %v538 = vsel %vm345, 0.0, %v537
  %v540 = vlaneseq
  %v541 = vshrl.u32 %v540, 7
  %v542 = vsub.s32 0, %v541
  %v543 = vrot.slane %v498, %v542
  %v546 = vlaneseq
  %v547 = vshrl.u32 %v546, 7
  %v548 = vsub.s32 0, %v547
  %v549 = vrot.slane %v527, %v548
  %v551 = vsel %vm52, %v357, %v364
  %vm552 = vcmask 1041408
  %v553 = vsel %vm552, %v551, %v364
  %vm554 = vcmask 1042432
  %v555 = vsel %vm554, %v553, %v466
  %vm556 = vcmask 1043456
  %v557 = vsel %vm556, %v555, %v467
  %vm558 = vcmask 1044480
  %v559 = vsel %vm558, %v557, %v468
  %vm560 = vcmask 1045504
  %v561 = vsel %vm560, %v559, %v543
  %vm562 = vcmask 1046528
  %v563 = vsel %vm562, %v561, %v549
  %564 = vst [vmem:[%s8] sm:$0xff] %v563
  %565 = vst [vmem:[%s8 + $0x8] sm:$0x1] %v538
  // Predicated region
  $region34: #{rotation_translation_net.1} parent=0 // pred_check
    _
  $region35: #{rotation_translation_net.1} parent=0 // pred_check_branch
    %567 = sbr.rel (0) target = $region37
  $region36: #{rotation_translation_net.1} parent=0 // pred_region
    _
  $region37: #{rotation_translation_net.1} parent=0 // pred_fallthru
    _
  // Predicated region
  $region38: #{rotation_translation_net.1} parent=0 // pred_check
    _
  $region39: #{rotation_translation_net.1} parent=0 // pred_check_branch
    %569 = sbr.rel (0) target = $region41
  $region40: #{rotation_translation_net.1} parent=0 // pred_region
    _
  $region41: #{rotation_translation_net.1} parent=0 // pred_fallthru
    _

</llo_original>
